<compile_context>
chip_gen: v7x
topology: tpu7x:2x2x1
jax: 0.10.0
libtpu: 0.0.40
codegen_flags: <defaults>
</compile_context>

<pallas_src>
import math
import numpy as np

import jax
import jax.numpy as jnp
from jax.experimental import pallas as pl
from jax.experimental.pallas import tpu as pltpu


def _lix_kernel(offs_ref, fracs_ref, x_ref, out_ref, padbuf):
    """Per-sample replicate-pad + zero-ring + 4-tap bilinear gather.

    offs_ref  : SMEM int32 (N, 2)   -> (oy, ox) window offsets into padbuf
    fracs_ref : SMEM f32   (N, 2)   -> (fy, fx) bilinear fractions
    x_ref     : VMEM (1, H, W, C)   raw input block (channel-last)
    out_ref   : VMEM (1, H, W, C)   output block
    padbuf    : VMEM (Hpp, Wpp, C)  scratch: zero ring + replicate-padded sample
    """
    n = pl.program_id(0)
    h, w, c = out_ref.shape[1], out_ref.shape[2], out_ref.shape[3]
    hpp, wpp = padbuf.shape[0], padbuf.shape[1]
    p = (hpp - h - 2) // 2                     # replicate-pad width (static)
    dt = padbuf.dtype

    x0 = x_ref[0]                              # (h, w, c)

    # ---- build the padded sample in VMEM: 1-px zero ring + replicate pad ----
    # Re-zero the ring every step (cheap, and megacore-safe for "parallel" grids).
    padbuf[0:1, :, :] = jnp.zeros((1, wpp, c), dt)
    padbuf[hpp - 1:hpp, :, :] = jnp.zeros((1, wpp, c), dt)
    padbuf[:, 0:1, :] = jnp.zeros((hpp, 1, c), dt)
    padbuf[:, wpp - 1:wpp, :] = jnp.zeros((hpp, 1, c), dt)

    # center
    padbuf[1 + p:1 + p + h, 1 + p:1 + p + w, :] = x0
    # replicate top / bottom rows (broadcast along the untiled major axis)
    padbuf[1:1 + p, 1 + p:1 + p + w, :] = jnp.broadcast_to(x0[0:1], (p, w, c))
    padbuf[1 + p + h:1 + 2 * p + h, 1 + p:1 + p + w, :] = (
        jnp.broadcast_to(x0[h - 1:h], (p, w, c)))
    # replicate left / right columns (also fills the corners); p is tiny, so a
    # short unrolled loop of narrow stores avoids any sublane-broadcast relayout.
    lcol = padbuf[1:hpp - 1, 1 + p:2 + p, :]           # (hpp-2, 1, c)
    rcol = padbuf[1:hpp - 1, p + w:p + w + 1, :]       # (hpp-2, 1, c)
    for k in range(p):
        padbuf[1:hpp - 1, 1 + k:2 + k, :] = lcol
        padbuf[1:hpp - 1, 1 + p + w + k:2 + p + w + k, :] = rcol

    # ---- separable bilinear blend of the (h+1, w+1, c) shifted window ----
    oy = offs_ref[n, 0]
    ox = offs_ref[n, 1]
    fy = fracs_ref[n, 0]
    fx = fracs_ref[n, 1]

    win = padbuf[pl.ds(oy, h + 1), pl.ds(ox, w + 1), :].astype(jnp.float32)
    left = win[:, :w, :]
    row = left + fx * (win[:, 1:, :] - left)           # blend along W  (h+1, w, c)
    top = row[:h]
    out = top + fy * (row[1:] - top)                   # blend along H  (h, w, c)
    out_ref[0] = out.astype(out_ref.dtype)


def _sample_shift(key, n, pad_i, max_normalized_shift, base_ratio, fixed_batch):
    """torch.rand-style per-sample shift; always float32 (review item)."""
    mns = max_normalized_shift * base_ratio
    shp = (1, 2) if fixed_batch else (n, 2)
    shift = jax.random.uniform(key, shp, dtype=jnp.float32)
    if fixed_batch:
        shift = jnp.broadcast_to(shift, (n, 2))
    shift = shift * mns + (1.0 - mns) / 2.0
    shift = shift * (2.0 * pad_i + 1.0)
    return shift                                       # (n, 2): (shift_x, shift_y)


def local_signal_mixing(x, key, pad, max_normalized_shift=1.0,
                        fixed_batch=False, training=True):
    """JAX/Pallas equivalent of LocalSignalMixing.forward. x: (N, C, H, W)."""
    if not training:
        return x

    n, c, h, w = x.shape
    assert h == w, "module requires square spatial dims"

    pad_i = int(math.ceil(pad)) + 1
    base_ratio = (2.0 * pad + 1.0) / (2.0 * pad_i + 1.0)
    shift = _sample_shift(key, n, pad_i, max_normalized_shift, base_ratio, fixed_batch)

    # grid_sample(align_corners=False) unnormalized coordinate = base + shift - 0.5
    coord = shift - 0.5
    base = jnp.floor(coord)
    frac = (coord - base).astype(jnp.float32)
    base_i = base.astype(jnp.int32) + 1                # +1 for the in-kernel zero ring
    offs = jnp.stack([base_i[:, 1], base_i[:, 0]], axis=-1).astype(jnp.int32)   # (oy, ox)
    offs = jnp.clip(offs, 0, 2 * pad_i + 1)            # pl.ds into VMEM is unchecked
    fracs = jnp.stack([frac[:, 1], frac[:, 0]], axis=-1).astype(jnp.float32)    # (fy, fx)

    # Channel-last so C sits on the lane axis (lane-dense stores, no lane shifts).
    x_nhwc = jnp.transpose(x, (0, 2, 3, 1))
    hpp = h + 2 * pad_i + 2
    wpp = w + 2 * pad_i + 2

    blk_bytes = h * w * c * x.dtype.itemsize
    scratch_bytes = hpp * wpp * c * x.dtype.itemsize
    vmem_limit = int(min(56 * 2**20, max(32 * 2**20, 8 * blk_bytes + 2 * scratch_bytes)))

    # TODO(synk): for very large C*H*W (v7x, 64 MiB VMEM) add a channel-tile grid
    # axis; for tiny images, fold several samples into one grid step to beat the
    # ~0.35 us per-step overhead.
    out_nhwc = pl.pallas_call(
        _lix_kernel,
        out_shape=jax.ShapeDtypeStruct((n, h, w, c), x.dtype),
        grid_spec=pltpu.PrefetchScalarGridSpec(
            num_scalar_prefetch=1,                                    # offs -> SMEM
            grid=(n,),
            in_specs=[
                pl.BlockSpec(memory_space=pltpu.MemorySpace.SMEM),    # fracs (f32)
                pl.BlockSpec((1, h, w, c), lambda i, offs: (i, 0, 0, 0)),
            ],
            out_specs=pl.BlockSpec((1, h, w, c), lambda i, offs: (i, 0, 0, 0)),
            scratch_shapes=[pltpu.VMEM((hpp, wpp, c), x.dtype)],
        ),
        compiler_params=pltpu.CompilerParams(
            dimension_semantics=("parallel",),
            vmem_limit_bytes=vmem_limit,
        ),
    )(offs, fracs, x_nhwc)

    return jnp.transpose(out_nhwc, (0, 3, 1, 2))


def _reference(xp, shift, h, w):
    """Pure-JAX bilinear grid_sample (zeros padding, align_corners=False)."""
    n, c, Hp, Wp = xp.shape
    jj = jnp.arange(w, dtype=jnp.float32)
    ii = jnp.arange(h, dtype=jnp.float32)
    xs = jj[None, :] + shift[:, 0:1] - 0.5   # (n, w)
    ys = ii[None, :] + shift[:, 1:2] - 0.5   # (n, h)
    x0f, y0f = jnp.floor(xs), jnp.floor(ys)
    fx, fy = xs - x0f, ys - y0f
    x0, y0 = x0f.astype(jnp.int32), y0f.astype(jnp.int32)

    def per_sample(img, y0n, x0n, fyn, fxn):
        def grab(yi, xi):
            valid = ((yi >= 0) & (yi < Hp))[:, None] & ((xi >= 0) & (xi < Wp))[None, :]
            yc = jnp.clip(yi, 0, Hp - 1)
            xc = jnp.clip(xi, 0, Wp - 1)
            g = img[:, yc[:, None], xc[None, :]]
            return jnp.where(valid[None], g, 0.0)
        return (((1 - fyn)[:, None] * (1 - fxn)[None, :])[None] * grab(y0n, x0n)
                + ((1 - fyn)[:, None] * fxn[None, :])[None] * grab(y0n, x0n + 1)
                + (fyn[:, None] * (1 - fxn)[None, :])[None] * grab(y0n + 1, x0n)
                + (fyn[:, None] * fxn[None, :])[None] * grab(y0n + 1, x0n + 1))

    return jax.vmap(per_sample)(xp, y0, x0, fy, fx)


if __name__ == "__main__":
    key = jax.random.PRNGKey(0)
    kx, ks = jax.random.split(key)

    N, C, H, W = 2, 4, 16, 16
    pad = 2.0                       # -> pad_i = 3
    x = jax.random.normal(kx, (N, C, H, W), dtype=jnp.float32)

    out = local_signal_mixing(x, ks, pad, max_normalized_shift=1.0,
                              fixed_batch=False, training=True)
    out = jax.block_until_ready(out)
    assert out.shape == (N, C, H, W)

    # Pure-JAX grid_sample reference (recompute the identical deterministic shift).
    pad_i = int(math.ceil(pad)) + 1
    base_ratio = (2.0 * pad + 1.0) / (2.0 * pad_i + 1.0)
    shift = _sample_shift(ks, N, pad_i, 1.0, base_ratio, False)
    xp = jnp.pad(x, ((0, 0), (0, 0), (pad_i, pad_i), (pad_i, pad_i)), mode="edge")
    ref = jax.block_until_ready(_reference(xp, shift, H, W))
    np.testing.assert_allclose(np.asarray(out), np.asarray(ref), rtol=1e-5, atol=1e-5)

    print("KERNEL_OK")
</pallas_src>

<mosaic_0001>
module attributes {stable_mosaic.version = 11 : i64} {
  func.func @_lix_kernel(%arg0: i32, %arg1: memref<2x2xi32, #tpu.memory_space<smem>>, %arg2: memref<2x2xf32, #tpu.memory_space<smem>>, %arg3: memref<1x16x16x4xf32, #tpu.memory_space<vmem>>, %arg4: memref<1x16x16x4xf32, #tpu.memory_space<vmem>>, %arg5: memref<24x24x4xf32, #tpu.memory_space<vmem>>) attributes {dimension_semantics = [#tpu.dimension_semantics<parallel>], iteration_bounds = array<i64: 2>, scalar_prefetch = 1 : i64, scratch_operands = 1 : i64, tpu.core_type = #tpu.core_type<tc>, window_params = [{transform_indices = @transform_0, window_bounds = array<i64: 2, 2>}, {transform_indices = @transform_1, window_bounds = array<i64: 1, 16, 16, 4>}, {transform_indices = @transform_2, window_bounds = array<i64: 1, 16, 16, 4>}]} {
    %c0 = arith.constant 0 : index
    %c0_0 = arith.constant 0 : index
    %c0_1 = arith.constant 0 : index
    %c0_2 = arith.constant 0 : index
    %0 = vector.load %arg3[%c0, %c0_0, %c0_1, %c0_2] : memref<1x16x16x4xf32, #tpu.memory_space<vmem>>, vector<1x16x16x4xf32>
    %1 = vector.shape_cast %0 : vector<1x16x16x4xf32> to vector<16x16x4xf32>
    %cst = arith.constant 0.000000e+00 : f32
    %2 = vector.broadcast %cst : f32 to vector<1x24x4xf32>
    %c0_3 = arith.constant 0 : index
    %c0_4 = arith.constant 0 : index
    %c0_5 = arith.constant 0 : index
    %3 = vector.load %arg5[%c0_3, %c0_4, %c0_5] : memref<24x24x4xf32, #tpu.memory_space<vmem>>, vector<1x24x4xf32>
    tpu.vector_store %arg5[%c0_3, %c0_4, %c0_5], %2 {strides = array<i32>} : memref<24x24x4xf32, #tpu.memory_space<vmem>>, vector<1x24x4xf32>,
    %cst_6 = arith.constant 0.000000e+00 : f32
    %4 = vector.broadcast %cst_6 : f32 to vector<1x24x4xf32>
    %c23 = arith.constant 23 : index
    %c0_7 = arith.constant 0 : index
    %c0_8 = arith.constant 0 : index
    %5 = vector.load %arg5[%c23, %c0_7, %c0_8] : memref<24x24x4xf32, #tpu.memory_space<vmem>>, vector<1x24x4xf32>
    tpu.vector_store %arg5[%c23, %c0_7, %c0_8], %4 {strides = array<i32>} : memref<24x24x4xf32, #tpu.memory_space<vmem>>, vector<1x24x4xf32>,
    %cst_9 = arith.constant 0.000000e+00 : f32
    %6 = vector.broadcast %cst_9 : f32 to vector<24x1x4xf32>
    %c0_10 = arith.constant 0 : index
    %c0_11 = arith.constant 0 : index
    %c0_12 = arith.constant 0 : index
    %7 = vector.load %arg5[%c0_10, %c0_11, %c0_12] : memref<24x24x4xf32, #tpu.memory_space<vmem>>, vector<24x1x4xf32>
    tpu.vector_store %arg5[%c0_10, %c0_11, %c0_12], %6 {strides = array<i32>} : memref<24x24x4xf32, #tpu.memory_space<vmem>>, vector<24x1x4xf32>,
    %cst_13 = arith.constant 0.000000e+00 : f32
    %8 = vector.broadcast %cst_13 : f32 to vector<24x1x4xf32>
    %c0_14 = arith.constant 0 : index
    %c23_15 = arith.constant 23 : index
    %c0_16 = arith.constant 0 : index
    %9 = vector.load %arg5[%c0_14, %c23_15, %c0_16] : memref<24x24x4xf32, #tpu.memory_space<vmem>>, vector<24x1x4xf32>
    tpu.vector_store %arg5[%c0_14, %c23_15, %c0_16], %8 {strides = array<i32>} : memref<24x24x4xf32, #tpu.memory_space<vmem>>, vector<24x1x4xf32>,
    %c4 = arith.constant 4 : index
    %c4_17 = arith.constant 4 : index
    %c0_18 = arith.constant 0 : index
    %10 = vector.load %arg5[%c4, %c4_17, %c0_18] : memref<24x24x4xf32, #tpu.memory_space<vmem>>, vector<16x16x4xf32>
    tpu.vector_store %arg5[%c4, %c4_17, %c0_18], %1 {strides = array<i32>} : memref<24x24x4xf32, #tpu.memory_space<vmem>>, vector<16x16x4xf32>,
    %11 = vector.extract_strided_slice %1 {offsets = [0, 0, 0], sizes = [1, 16, 4], strides = [1, 1, 1]} : vector<16x16x4xf32> to vector<1x16x4xf32>
    %12 = vector.shape_cast %11 : vector<1x16x4xf32> to vector<1x16x4xf32>
    %13 = vector.broadcast %12 : vector<1x16x4xf32> to vector<3x16x4xf32>
    %c1 = arith.constant 1 : index
    %c4_19 = arith.constant 4 : index
    %c0_20 = arith.constant 0 : index
    %14 = vector.load %arg5[%c1, %c4_19, %c0_20] : memref<24x24x4xf32, #tpu.memory_space<vmem>>, vector<3x16x4xf32>
    tpu.vector_store %arg5[%c1, %c4_19, %c0_20], %13 {strides = array<i32>} : memref<24x24x4xf32, #tpu.memory_space<vmem>>, vector<3x16x4xf32>,
    %15 = vector.extract_strided_slice %1 {offsets = [15, 0, 0], sizes = [1, 16, 4], strides = [1, 1, 1]} : vector<16x16x4xf32> to vector<1x16x4xf32>
    %16 = vector.shape_cast %15 : vector<1x16x4xf32> to vector<1x16x4xf32>
    %17 = vector.broadcast %16 : vector<1x16x4xf32> to vector<3x16x4xf32>
    %c20 = arith.constant 20 : index
    %c4_21 = arith.constant 4 : index
    %c0_22 = arith.constant 0 : index
    %18 = vector.load %arg5[%c20, %c4_21, %c0_22] : memref<24x24x4xf32, #tpu.memory_space<vmem>>, vector<3x16x4xf32>
    tpu.vector_store %arg5[%c20, %c4_21, %c0_22], %17 {strides = array<i32>} : memref<24x24x4xf32, #tpu.memory_space<vmem>>, vector<3x16x4xf32>,
    %c1_23 = arith.constant 1 : index
    %c4_24 = arith.constant 4 : index
    %c0_25 = arith.constant 0 : index
    %19 = vector.load %arg5[%c1_23, %c4_24, %c0_25] : memref<24x24x4xf32, #tpu.memory_space<vmem>>, vector<22x1x4xf32>
    %c1_26 = arith.constant 1 : index
    %c19 = arith.constant 19 : index
    %c0_27 = arith.constant 0 : index
    %20 = vector.load %arg5[%c1_26, %c19, %c0_27] : memref<24x24x4xf32, #tpu.memory_space<vmem>>, vector<22x1x4xf32>
    %c1_28 = arith.constant 1 : index
    %c1_29 = arith.constant 1 : index
    %c0_30 = arith.constant 0 : index
    %21 = vector.load %arg5[%c1_28, %c1_29, %c0_30] : memref<24x24x4xf32, #tpu.memory_space<vmem>>, vector<22x1x4xf32>
    tpu.vector_store %arg5[%c1_28, %c1_29, %c0_30], %19 {strides = array<i32>} : memref<24x24x4xf32, #tpu.memory_space<vmem>>, vector<22x1x4xf32>,
    %c1_31 = arith.constant 1 : index
    %c20_32 = arith.constant 20 : index
    %c0_33 = arith.constant 0 : index
    %22 = vector.load %arg5[%c1_31, %c20_32, %c0_33] : memref<24x24x4xf32, #tpu.memory_space<vmem>>, vector<22x1x4xf32>
    tpu.vector_store %arg5[%c1_31, %c20_32, %c0_33], %20 {strides = array<i32>} : memref<24x24x4xf32, #tpu.memory_space<vmem>>, vector<22x1x4xf32>,
    %c1_34 = arith.constant 1 : index
    %c2 = arith.constant 2 : index
    %c0_35 = arith.constant 0 : index
    %23 = vector.load %arg5[%c1_34, %c2, %c0_35] : memref<24x24x4xf32, #tpu.memory_space<vmem>>, vector<22x1x4xf32>
    tpu.vector_store %arg5[%c1_34, %c2, %c0_35], %19 {strides = array<i32>} : memref<24x24x4xf32, #tpu.memory_space<vmem>>, vector<22x1x4xf32>,
    %c1_36 = arith.constant 1 : index
    %c21 = arith.constant 21 : index
    %c0_37 = arith.constant 0 : index
    %24 = vector.load %arg5[%c1_36, %c21, %c0_37] : memref<24x24x4xf32, #tpu.memory_space<vmem>>, vector<22x1x4xf32>
    tpu.vector_store %arg5[%c1_36, %c21, %c0_37], %20 {strides = array<i32>} : memref<24x24x4xf32, #tpu.memory_space<vmem>>, vector<22x1x4xf32>,
    %c1_38 = arith.constant 1 : index
    %c3 = arith.constant 3 : index
    %c0_39 = arith.constant 0 : index
    %25 = vector.load %arg5[%c1_38, %c3, %c0_39] : memref<24x24x4xf32, #tpu.memory_space<vmem>>, vector<22x1x4xf32>
    tpu.vector_store %arg5[%c1_38, %c3, %c0_39], %19 {strides = array<i32>} : memref<24x24x4xf32, #tpu.memory_space<vmem>>, vector<22x1x4xf32>,
    %c1_40 = arith.constant 1 : index
    %c22 = arith.constant 22 : index
    %c0_41 = arith.constant 0 : index
    %26 = vector.load %arg5[%c1_40, %c22, %c0_41] : memref<24x24x4xf32, #tpu.memory_space<vmem>>, vector<22x1x4xf32>
    tpu.vector_store %arg5[%c1_40, %c22, %c0_41], %20 {strides = array<i32>} : memref<24x24x4xf32, #tpu.memory_space<vmem>>, vector<22x1x4xf32>,
    %27 = arith.index_cast %arg0 : i32 to index
    %c0_42 = arith.constant 0 : index
    %28 = memref.load %arg1[%27, %c0_42] : memref<2x2xi32, #tpu.memory_space<smem>>
    %29 = arith.index_cast %arg0 : i32 to index
    %c1_43 = arith.constant 1 : index
    %30 = memref.load %arg1[%29, %c1_43] : memref<2x2xi32, #tpu.memory_space<smem>>
    %31 = arith.index_cast %arg0 : i32 to index
    %c0_44 = arith.constant 0 : index
    %32 = memref.load %arg2[%31, %c0_44] : memref<2x2xf32, #tpu.memory_space<smem>>
    %33 = arith.index_cast %arg0 : i32 to index
    %c1_45 = arith.constant 1 : index
    %34 = memref.load %arg2[%33, %c1_45] : memref<2x2xf32, #tpu.memory_space<smem>>
    %35 = arith.index_cast %28 : i32 to index
    %36 = arith.index_cast %30 : i32 to index
    %c0_46 = arith.constant 0 : index
    %37 = vector.load %arg5[%35, %36, %c0_46] : memref<24x24x4xf32, #tpu.memory_space<vmem>>, vector<17x17x4xf32>
    %38 = vector.extract_strided_slice %37 {offsets = [0, 0, 0], sizes = [17, 16, 4], strides = [1, 1, 1]} : vector<17x17x4xf32> to vector<17x16x4xf32>
    %39 = vector.extract_strided_slice %37 {offsets = [0, 1, 0], sizes = [17, 16, 4], strides = [1, 1, 1]} : vector<17x17x4xf32> to vector<17x16x4xf32>
    %40 = arith.subf %39, %38 : vector<17x16x4xf32>
    %41 = vector.broadcast %34 : f32 to vector<17x16x4xf32>
    %42 = arith.mulf %41, %40 : vector<17x16x4xf32>
    %43 = arith.addf %38, %42 : vector<17x16x4xf32>
    %44 = vector.extract_strided_slice %43 {offsets = [0, 0, 0], sizes = [16, 16, 4], strides = [1, 1, 1]} : vector<17x16x4xf32> to vector<16x16x4xf32>
    %45 = vector.extract_strided_slice %43 {offsets = [1, 0, 0], sizes = [16, 16, 4], strides = [1, 1, 1]} : vector<17x16x4xf32> to vector<16x16x4xf32>
    %46 = arith.subf %45, %44 : vector<16x16x4xf32>
    %47 = vector.broadcast %32 : f32 to vector<16x16x4xf32>
    %48 = arith.mulf %47, %46 : vector<16x16x4xf32>
    %49 = arith.addf %44, %48 : vector<16x16x4xf32>
    %c0_47 = arith.constant 0 : index
    %c0_48 = arith.constant 0 : index
    %c0_49 = arith.constant 0 : index
    %c0_50 = arith.constant 0 : index
    %50 = vector.load %arg4[%c0_47, %c0_48, %c0_49, %c0_50] : memref<1x16x16x4xf32, #tpu.memory_space<vmem>>, vector<1x16x16x4xf32>
    %51 = vector.shape_cast %50 : vector<1x16x16x4xf32> to vector<16x16x4xf32>
    %52 = vector.shape_cast %49 : vector<16x16x4xf32> to vector<1x16x16x4xf32>
    tpu.vector_store %arg4[%c0_47, %c0_48, %c0_49, %c0_50], %52 {strides = array<i32>} : memref<1x16x16x4xf32, #tpu.memory_space<vmem>>, vector<1x16x16x4xf32>,
    return
  }
  func.func @transform_0(%arg0: i32, %arg1: memref<2x2xi32, #tpu.memory_space<smem>>) -> (i32, i32) {
    %c0_i32 = arith.constant 0 : i32
    %c0_i32_0 = arith.constant 0 : i32
    %c0_i32_1 = arith.constant 0 : i32
    return %c0_i32, %c0_i32_0 : i32, i32
  }
  func.func @transform_1(%arg0: i32, %arg1: memref<2x2xi32, #tpu.memory_space<smem>>) -> (i32, i32, i32, i32) {
    %c0_i32 = arith.constant 0 : i32
    %c0_i32_0 = arith.constant 0 : i32
    %c0_i32_1 = arith.constant 0 : i32
    %c0_i32_2 = arith.constant 0 : i32
    return %arg0, %c0_i32, %c0_i32_0, %c0_i32_1 : i32, i32, i32, i32
  }
  func.func @transform_2(%arg0: i32, %arg1: memref<2x2xi32, #tpu.memory_space<smem>>) -> (i32, i32, i32, i32) {
    %c0_i32 = arith.constant 0 : i32
    %c0_i32_0 = arith.constant 0 : i32
    %c0_i32_1 = arith.constant 0 : i32
    %c0_i32_2 = arith.constant 0 : i32
    return %arg0, %c0_i32, %c0_i32_0, %c0_i32_1 : i32, i32, i32, i32
  }
}

</mosaic_0001>

<llo_original>
// kernel: tpu_custom_call.1
$region0: #{tpu_custom_call.1}
  #allocation0 [shape = 'u32[]', space=smem, size = 0x4, offset = 0x4, fixed_abs, tag = 'smem constant byte address 0x4 - core index']
  #allocation1 [shape = 'u32[144,128]{1,0:T(1,128)}', space=vmem, size = 0x12000, scoped, tag = 'internal scratch']
  #allocation2 [shape = 'f32[24,24,4]{2,1,0:T(8,128)}', space=vmem, size = 0x48000, scoped, tag = 'scratch operand']
  #allocation3 [shape = 's32[1]{0}', space=sflag, size = 0x4, scoped, tag = 'scoped memory for tpu_custom_call.1']
  #allocation4 [shape = 'u8[1024]{0}', space=smem, size = 0x400, scoped, tag = 'prefetched SMEM operand 0']
  %s0 = inlined_call_operand.vmem [shape: s32[2,2], index: 0, kind: input, shape index: {}]
  %s1 = inlined_call_operand.vmem [shape: f32[2,2], index: 1, kind: input, shape index: {}]
  %s2 = inlined_call_operand.vmem [shape: f32[2,16,16,4], index: 2, kind: input, shape index: {}]
  %s3 = inlined_call_operand.vmem [shape: f32[2,16,16,4], index: 3, kind: output, shape index: {}]
  %s4 = sld [smem:[#allocation0]]
  $region45: #{tpu_custom_call.1} parent=0
    _
  %s6 = ssub.s32 1, %s4
  %s7 = scalar_select 0, %s6, %s4
  %s8 = sshll.u32 %s0, 4
  %s9 = int_to_ptr.vmem [resolvable:$true] %s8
  %11 = dma.vmem_to_smem %s9, 32, [#allocation4], [#allocation3]
  %12 = dma.done [#allocation3], 32
  %13 = sfence
  $region1: #{tpu_custom_call.1} parent=0
    #allocation5 [shape = 'u8[1024]{0}', space=smem, size = 0x400, scoped, tag = 'input window, operand 1, single buffered']
    #allocation6 [shape = 's32[2]{0}', space=sflag, size = 0x8, scoped, tag = 'scoped memory for tpu_custom_call.1']
    %14 = vsyncpa [#allocation6], 0
    loop: start=0, step=1, limit=4
    $region2: #{tpu_custom_call.1} parent=1 // loop_pre_header
      _
    $region3: #{tpu_custom_call.1} parent=1 // loop_header
      %s16 = sphi 0, %s20
      %p17 = scmp.ge.s32.totalorder %s16, 4
      %s24 = sphi 0, %s24
      %s26 = sphi 0, %s24
      %s27 = sphi 0, %s26
      %s41 = sphi 0, %s27
      %s47 = sphi 0, %s49
      %s50 = sphi 0, %s47
      %s51 = sphi 0, %s50
      %s67 = sphi 0, %s51
      %s73 = sphi 0, %s75
      %s76 = sphi 0, %s73
      %s77 = sphi 0, %s76
      %s93 = sphi 0, %s77
    $region4: #{tpu_custom_call.1} parent=1 // loop_header_branch
      %19 = sbr.rel (%p17) target = $region8
    $region5: #{tpu_custom_call.1} parent=1 // loop_body
      %s21 = ssub.s32 %s16, 1
      %s22 = ssub.s32 %s16, 2
      %s23 = sadd.s32 %s16, 1
      %s25 = sadd.s32 %s24, 1
      %p28 = scmp.eq.s32.totalorder %s16, 1
      %p29 = scmp.ne.s32.totalorder %s24, %s26
      %p30 = scmp.eq.s32.totalorder %s16, 0
      %p31 = por %p29, %p30
      %p32 = scmp.ne.s32.totalorder %s24, %s26
      %p33 = scmp.eq.s32.totalorder %s21, 1
      %p34 = por %p32, %p33
      %p35 = scmp.ne.s32.totalorder %s26, %s27
      %p36 = scmp.eq.s32.totalorder %s21, 0
      %p37 = por %p35, %p36
      %p38 = scmp.ne.s32.totalorder %s26, %s27
      %p39 = scmp.eq.s32.totalorder %s22, 1
      %p40 = por %p38, %p39
      %p42 = scmp.ne.s32.totalorder %s27, %s41
      %p43 = scmp.eq.s32.totalorder %s22, 0
      %p44 = por %p42, %p43
      %s45 = ssub.s32 %s16, %s23
      %p46 = scmp.eq.s32.totalorder %s45, 0
      %s48 = sadd.s32 %s47, 1
      %s49 = scalar_select %p46, %s47, %s48
      %p52 = pneg %p46
      %p53 = scmp.eq.s32.totalorder %s16, 1
      %p54 = por %p52, %p53
      %p55 = scmp.ne.s32.totalorder %s47, %s50
      %p56 = scmp.eq.s32.totalorder %s16, 0
      %p57 = por %p55, %p56
      %p58 = scmp.ne.s32.totalorder %s47, %s50
      %p59 = scmp.eq.s32.totalorder %s21, 1
      %p60 = por %p58, %p59
      %p61 = scmp.ne.s32.totalorder %s50, %s51
      %p62 = scmp.eq.s32.totalorder %s21, 0
      %p63 = por %p61, %p62
      %p64 = scmp.ne.s32.totalorder %s50, %s51
      %p65 = scmp.eq.s32.totalorder %s22, 1
      %p66 = por %p64, %p65
      %p68 = scmp.ne.s32.totalorder %s51, %s67
      %p69 = scmp.eq.s32.totalorder %s22, 0
      %p70 = por %p68, %p69
      %s71 = ssub.s32 %s16, %s23
      %p72 = scmp.eq.s32.totalorder %s71, 0
      %s74 = sadd.s32 %s73, 1
      %s75 = scalar_select %p72, %s73, %s74
      %p78 = pneg %p72
      %p79 = scmp.eq.s32.totalorder %s16, 1
      %p80 = por %p78, %p79
      %p81 = scmp.ne.s32.totalorder %s73, %s76
      %p82 = scmp.eq.s32.totalorder %s16, 0
      %p83 = por %p81, %p82
      %p84 = scmp.ne.s32.totalorder %s73, %s76
      %p85 = scmp.eq.s32.totalorder %s21, 1
      %p86 = por %p84, %p85
      %p87 = scmp.ne.s32.totalorder %s76, %s77
      %p88 = scmp.eq.s32.totalorder %s21, 0
      %p89 = por %p87, %p88
      %p90 = scmp.ne.s32.totalorder %s76, %s77
      %p91 = scmp.eq.s32.totalorder %s22, 1
      %p92 = por %p90, %p91
      %p94 = scmp.ne.s32.totalorder %s77, %s93
      %p95 = scmp.eq.s32.totalorder %s22, 0
      %p96 = por %p94, %p95
      %p97 = scmp.le.s32.totalorder 1, %s16
      %p98 = scmp.lt.s32.totalorder %s16, 3
      %p99 = pnand %p97, %p98
      %p100 = pneg %p99
      // Predicated region
      $region9: #{tpu_custom_call.1} parent=5 // pred_check
        _
      $region10: #{tpu_custom_call.1} parent=5 // pred_check_branch
        %102 = sbr.rel (%p99) target = $region12
      $region11: #{tpu_custom_call.1} parent=5 // pred_region
        %s103 = ssub.s32 %s16, 1
        // Predicated region
        $region13: #{tpu_custom_call.1} parent=11 // pred_check
          %p104 = pneg %p37
        $region14: #{tpu_custom_call.1} parent=11 // pred_check_branch
          %106 = sbr.rel (%p104) target = $region16
        $region15: #{tpu_custom_call.1} parent=11 // pred_region
          %s108 = ssub.s32 32, 32
          %109 = vsyncadd [#allocation6], %s108
          %s111 = sshll.u32 %s1, 4
          %s112 = int_to_ptr.vmem [resolvable:$true] %s111
          %114 = dma.vmem_to_smem %s112, 32, [#allocation5], [#allocation6]
        $region16: #{tpu_custom_call.1} parent=11 // pred_fallthru
          _
      $region12: #{tpu_custom_call.1} parent=5 // pred_fallthru
        _
      %p115 = scmp.lt.s32.totalorder %s16, 2
      // Predicated region
      $region17: #{tpu_custom_call.1} parent=5 // pred_check
        %p116 = pneg %p115
      $region18: #{tpu_custom_call.1} parent=5 // pred_check_branch
        %118 = sbr.rel (%p116) target = $region20
      $region19: #{tpu_custom_call.1} parent=5 // pred_region
        // Predicated region
        $region21: #{tpu_custom_call.1} parent=19 // pred_check
          %p119 = pneg %p57
        $region22: #{tpu_custom_call.1} parent=19 // pred_check_branch
          %121 = sbr.rel (%p119) target = $region24
        $region23: #{tpu_custom_call.1} parent=19 // pred_region
          %p122 = scmp.lt.s32.totalorder %s16, 1
          %s123 = scalar_select %p122, %s16, 1
          %s124 = smul.addr %s123, 32
          %s125 = smul.addr %s124, 8
          %s126 = scalar_lea.vmem %s2, %s125
        $region24: #{tpu_custom_call.1} parent=19 // pred_fallthru
          _
      $region20: #{tpu_custom_call.1} parent=5 // pred_fallthru
        _
      %p127 = scmp.le.s32.totalorder 1, %s16
      %p128 = scmp.lt.s32.totalorder %s16, 3
      %p129 = pnand %p127, %p128
      %p130 = pneg %p129
      // Predicated region
      $region25: #{tpu_custom_call.1} parent=5 // pred_check
        _
      $region26: #{tpu_custom_call.1} parent=5 // pred_check_branch
        %132 = sbr.rel (%p129) target = $region28
      $region27: #{tpu_custom_call.1} parent=5 // pred_region
        %s133 = ssub.s32 %s16, 1
        // Predicated region
        $region29: #{tpu_custom_call.1} parent=27 // pred_check
          %p134 = pneg %p37
        $region30: #{tpu_custom_call.1} parent=27 // pred_check_branch
          %136 = sbr.rel (%p134) target = $region32
        $region31: #{tpu_custom_call.1} parent=27 // pred_region
          %137 = dma.done [#allocation6], 32
        $region32: #{tpu_custom_call.1} parent=27 // pred_fallthru
          _
        %138 = sfence
        %p139 = pneg %p37
        %p140 = pneg %p34
        %p141 = scmp.lt.s32.totalorder %s21, 1
        %s142 = scalar_select %p141, %s21, 1
        %s143 = smul.addr %s142, 32
        %s144 = smul.addr %s143, 8
        %s145 = scalar_lea.vmem %s2, %s144
        %p146 = pneg %p63
        %p147 = pneg %p60
        %p148 = pneg %p89
        %p149 = pneg %p86
        %p150 = scmp.lt.s32.totalorder %s21, 1
        %s151 = scalar_select %p150, %s21, 1
        %s152 = smul.addr %s151, 32
        %s153 = smul.addr %s152, 8
        %s154 = scalar_lea.vmem %s3, %s153
        %p155 = scmp.lt.s32.totalorder %s21, 1
        %s156 = scalar_select %p155, %s21, 1
        %s157 = smul.addr %s156, 32
        %s158 = smul.addr %s157, 8
        %s159 = scalar_lea.vmem %s2, %s158
        %p160 = scmp.lt.s32.totalorder %s21, 1
        %s161 = scalar_select %p160, %s21, 1
        %s162 = smul.addr %s161, 32
        %s163 = smul.addr %s162, 8
        %s164 = scalar_lea.vmem %s3, %s163
        %v165 = vld [vmem:[%s159] sm:$0xff]
        %v166 = vld [vmem:[%s159 + $0x8] sm:$0xff]
        %v167 = vld [vmem:[%s159 + $0x10] sm:$0xff]
        %v168 = vld [vmem:[%s159 + $0x18] sm:$0xff]
        %v169 = vld [vmem:[%s159 + $0x20] sm:$0xff]
        %v170 = vld [vmem:[%s159 + $0x28] sm:$0xff]
        %v171 = vld [vmem:[%s159 + $0x30] sm:$0xff]
        %v172 = vld [vmem:[%s159 + $0x38] sm:$0xff]
        %v173 = vld [vmem:[%s159 + $0x40] sm:$0xff]
        %v174 = vld [vmem:[%s159 + $0x48] sm:$0xff]
        %v175 = vld [vmem:[%s159 + $0x50] sm:$0xff]
        %v176 = vld [vmem:[%s159 + $0x58] sm:$0xff]
        %v177 = vld [vmem:[%s159 + $0x60] sm:$0xff]
        %v178 = vld [vmem:[%s159 + $0x68] sm:$0xff]
        %v179 = vld [vmem:[%s159 + $0x70] sm:$0xff]
        %v180 = vld [vmem:[%s159 + $0x78] sm:$0xff]
        %v181 = vld [vmem:[%s159 + $0x80] sm:$0xff]
        %v182 = vld [vmem:[%s159 + $0x88] sm:$0xff]
        %v183 = vld [vmem:[%s159 + $0x90] sm:$0xff]
        %v184 = vld [vmem:[%s159 + $0x98] sm:$0xff]
        %v185 = vld [vmem:[%s159 + $0xa0] sm:$0xff]
        %v186 = vld [vmem:[%s159 + $0xa8] sm:$0xff]
        %v187 = vld [vmem:[%s159 + $0xb0] sm:$0xff]
        %v188 = vld [vmem:[%s159 + $0xb8] sm:$0xff]
        %v189 = vld [vmem:[%s159 + $0xc0] sm:$0xff]
        %v190 = vld [vmem:[%s159 + $0xc8] sm:$0xff]
        %v191 = vld [vmem:[%s159 + $0xd0] sm:$0xff]
        %v192 = vld [vmem:[%s159 + $0xd8] sm:$0xff]
        %v193 = vld [vmem:[%s159 + $0xe0] sm:$0xff]
        %v194 = vld [vmem:[%s159 + $0xe8] sm:$0xff]
        %v195 = vld [vmem:[%s159 + $0xf0] sm:$0xff]
        %v196 = vld [vmem:[%s159 + $0xf8] sm:$0xff]
        %vm197 = vcmask 31744
        %198 = vst.msk [vmem:[#allocation2] sm:$0xff] %vm197, 0.0
        %199 = vst.msk [vmem:[#allocation2 + $0x8] sm:$0xff] %vm197, 0.0
        %200 = vst.msk [vmem:[#allocation2 + $0x10] sm:$0xff] %vm197, 0.0
        %s201 = scalar_lea.vmem [#allocation2], 552
        %202 = vst.msk [vmem:[%s201] sm:$0xff] %vm197, 0.0
        %203 = vst.msk [vmem:[%s201 + $0x8] sm:$0xff] %vm197, 0.0
        %204 = vst.msk [vmem:[%s201 + $0x10] sm:$0xff] %vm197, 0.0
        %vm205 = vcmask 24576
        %206 = vst.msk [vmem:[#allocation2] sm:$0x1] %vm205, 0.0
        %207 = vst.msk [vmem:[#allocation2 + $0x18] sm:$0x1] %vm205, 0.0
        %208 = vst.msk [vmem:[#allocation2 + $0x30] sm:$0x1] %vm205, 0.0
        %209 = vst.msk [vmem:[#allocation2 + $0x48] sm:$0x1] %vm205, 0.0
        %210 = vst.msk [vmem:[#allocation2 + $0x60] sm:$0x1] %vm205, 0.0
        %211 = vst.msk [vmem:[#allocation2 + $0x78] sm:$0x1] %vm205, 0.0
        %212 = vst.msk [vmem:[#allocation2 + $0x90] sm:$0x1] %vm205, 0.0
        %213 = vst.msk [vmem:[#allocation2 + $0xa8] sm:$0x1] %vm205, 0.0
        %214 = vst.msk [vmem:[#allocation2 + $0xc0] sm:$0x1] %vm205, 0.0
        %215 = vst.msk [vmem:[#allocation2 + $0xd8] sm:$0x1] %vm205, 0.0
        %216 = vst.msk [vmem:[#allocation2 + $0xf0] sm:$0x1] %vm205, 0.0
        %217 = vst.msk [vmem:[#allocation2 + $0x108] sm:$0x1] %vm205, 0.0
        %218 = vst.msk [vmem:[#allocation2 + $0x120] sm:$0x1] %vm205, 0.0
        %219 = vst.msk [vmem:[#allocation2 + $0x138] sm:$0x1] %vm205, 0.0
        %220 = vst.msk [vmem:[#allocation2 + $0x150] sm:$0x1] %vm205, 0.0
        %221 = vst.msk [vmem:[#allocation2 + $0x168] sm:$0x1] %vm205, 0.0
        %222 = vst.msk [vmem:[#allocation2 + $0x180] sm:$0x1] %vm205, 0.0
        %223 = vst.msk [vmem:[#allocation2 + $0x198] sm:$0x1] %vm205, 0.0
        %224 = vst.msk [vmem:[#allocation2 + $0x1b0] sm:$0x1] %vm205, 0.0
        %225 = vst.msk [vmem:[#allocation2 + $0x1c8] sm:$0x1] %vm205, 0.0
        %226 = vst.msk [vmem:[#allocation2 + $0x1e0] sm:$0x1] %vm205, 0.0
        %227 = vst.msk [vmem:[#allocation2 + $0x1f8] sm:$0x1] %vm205, 0.0
        %228 = vst.msk [vmem:[#allocation2 + $0x210] sm:$0x1] %vm205, 0.0
        %229 = vst.msk [vmem:[#allocation2 + $0x228] sm:$0x1] %vm205, 0.0
        %230 = vst.msk [vmem:[#allocation2 + $0x17] sm:$0x1] %vm205, 0.0
        %231 = vst.msk [vmem:[#allocation2 + $0x2f] sm:$0x1] %vm205, 0.0
        %232 = vst.msk [vmem:[#allocation2 + $0x47] sm:$0x1] %vm205, 0.0
        %233 = vst.msk [vmem:[#allocation2 + $0x5f] sm:$0x1] %vm205, 0.0
        %234 = vst.msk [vmem:[#allocation2 + $0x77] sm:$0x1] %vm205, 0.0
        %235 = vst.msk [vmem:[#allocation2 + $0x8f] sm:$0x1] %vm205, 0.0
        %236 = vst.msk [vmem:[#allocation2 + $0xa7] sm:$0x1] %vm205, 0.0
        %237 = vst.msk [vmem:[#allocation2 + $0xbf] sm:$0x1] %vm205, 0.0
        %238 = vst.msk [vmem:[#allocation2 + $0xd7] sm:$0x1] %vm205, 0.0
        %239 = vst.msk [vmem:[#allocation2 + $0xef] sm:$0x1] %vm205, 0.0
        %240 = vst.msk [vmem:[#allocation2 + $0x107] sm:$0x1] %vm205, 0.0
        %241 = vst.msk [vmem:[#allocation2 + $0x11f] sm:$0x1] %vm205, 0.0
        %242 = vst.msk [vmem:[#allocation2 + $0x137] sm:$0x1] %vm205, 0.0
        %243 = vst.msk [vmem:[#allocation2 + $0x14f] sm:$0x1] %vm205, 0.0
        %244 = vst.msk [vmem:[#allocation2 + $0x167] sm:$0x1] %vm205, 0.0
        %245 = vst.msk [vmem:[#allocation2 + $0x17f] sm:$0x1] %vm205, 0.0
        %246 = vst.msk [vmem:[#allocation2 + $0x197] sm:$0x1] %vm205, 0.0
        %247 = vst.msk [vmem:[#allocation2 + $0x1af] sm:$0x1] %vm205, 0.0
        %248 = vst.msk [vmem:[#allocation2 + $0x1c7] sm:$0x1] %vm205, 0.0
        %249 = vst.msk [vmem:[#allocation2 + $0x1df] sm:$0x1] %vm205, 0.0
        %250 = vst.msk [vmem:[#allocation2 + $0x1f7] sm:$0x1] %vm205, 0.0
        %251 = vst.msk [vmem:[#allocation2 + $0x20f] sm:$0x1] %vm205, 0.0
        %252 = vst.msk [vmem:[#allocation2 + $0x227] sm:$0x1] %vm205, 0.0
        %253 = vst.msk [vmem:[#allocation2 + $0x23f] sm:$0x1] %vm205, 0.0
        %s254 = scalar_lea.vmem [#allocation2], 96
        %255 = vst.msk [vmem:[%s254 + $0x4] sm:$0xff] %vm197, %v165
        %256 = vst.msk [vmem:[%s254 + $0xc] sm:$0xff] %vm197, %v166
        %257 = vst.msk [vmem:[%s254 + $0x1c] sm:$0xff] %vm197, %v167
        %258 = vst.msk [vmem:[%s254 + $0x24] sm:$0xff] %vm197, %v168
        %259 = vst.msk [vmem:[%s254 + $0x34] sm:$0xff] %vm197, %v169
        %260 = vst.msk [vmem:[%s254 + $0x3c] sm:$0xff] %vm197, %v170
        %261 = vst.msk [vmem:[%s254 + $0x4c] sm:$0xff] %vm197, %v171
        %262 = vst.msk [vmem:[%s254 + $0x54] sm:$0xff] %vm197, %v172
        %263 = vst.msk [vmem:[%s254 + $0x64] sm:$0xff] %vm197, %v173
        %264 = vst.msk [vmem:[%s254 + $0x6c] sm:$0xff] %vm197, %v174
        %265 = vst.msk [vmem:[%s254 + $0x7c] sm:$0xff] %vm197, %v175
        %266 = vst.msk [vmem:[%s254 + $0x84] sm:$0xff] %vm197, %v176
        %267 = vst.msk [vmem:[%s254 + $0x94] sm:$0xff] %vm197, %v177
        %268 = vst.msk [vmem:[%s254 + $0x9c] sm:$0xff] %vm197, %v178
        %269 = vst.msk [vmem:[%s254 + $0xac] sm:$0xff] %vm197, %v179
        %270 = vst.msk [vmem:[%s254 + $0xb4] sm:$0xff] %vm197, %v180
        %271 = vst.msk [vmem:[%s254 + $0xc4] sm:$0xff] %vm197, %v181
        %272 = vst.msk [vmem:[%s254 + $0xcc] sm:$0xff] %vm197, %v182
        %273 = vst.msk [vmem:[%s254 + $0xdc] sm:$0xff] %vm197, %v183
        %274 = vst.msk [vmem:[%s254 + $0xe4] sm:$0xff] %vm197, %v184
        %275 = vst.msk [vmem:[%s254 + $0xf4] sm:$0xff] %vm197, %v185
        %276 = vst.msk [vmem:[%s254 + $0xfc] sm:$0xff] %vm197, %v186
        %277 = vst.msk [vmem:[%s254 + $0x10c] sm:$0xff] %vm197, %v187
        %278 = vst.msk [vmem:[%s254 + $0x114] sm:$0xff] %vm197, %v188
        %279 = vst.msk [vmem:[%s254 + $0x124] sm:$0xff] %vm197, %v189
        %280 = vst.msk [vmem:[%s254 + $0x12c] sm:$0xff] %vm197, %v190
        %281 = vst.msk [vmem:[%s254 + $0x13c] sm:$0xff] %vm197, %v191
        %282 = vst.msk [vmem:[%s254 + $0x144] sm:$0xff] %vm197, %v192
        %283 = vst.msk [vmem:[%s254 + $0x154] sm:$0xff] %vm197, %v193
        %284 = vst.msk [vmem:[%s254 + $0x15c] sm:$0xff] %vm197, %v194
        %285 = vst.msk [vmem:[%s254 + $0x16c] sm:$0xff] %vm197, %v195
        %286 = vst.msk [vmem:[%s254 + $0x174] sm:$0xff] %vm197, %v196
        %s287 = scalar_lea.vmem [#allocation2], 24
        %288 = vst.msk [vmem:[%s287 + $0x4] sm:$0xff] %vm197, %v165
        %289 = vst.msk [vmem:[%s287 + $0xc] sm:$0xff] %vm197, %v166
        %290 = vst.msk [vmem:[%s287 + $0x1c] sm:$0xff] %vm197, %v165
        %291 = vst.msk [vmem:[%s287 + $0x24] sm:$0xff] %vm197, %v166
        %292 = vst.msk [vmem:[%s287 + $0x34] sm:$0xff] %vm197, %v165
        %293 = vst.msk [vmem:[%s287 + $0x3c] sm:$0xff] %vm197, %v166
        %s294 = scalar_lea.vmem [#allocation2], 480
        %295 = vst.msk [vmem:[%s294 + $0x4] sm:$0xff] %vm197, %v195
        %296 = vst.msk [vmem:[%s294 + $0xc] sm:$0xff] %vm197, %v196
        %297 = vst.msk [vmem:[%s294 + $0x1c] sm:$0xff] %vm197, %v195
        %298 = vst.msk [vmem:[%s294 + $0x24] sm:$0xff] %vm197, %v196
        %299 = vst.msk [vmem:[%s294 + $0x34] sm:$0xff] %vm197, %v195
        %300 = vst.msk [vmem:[%s294 + $0x3c] sm:$0xff] %vm197, %v196
        %v301 = vld [vmem:[%s287 + $0x4] sm:$0x1]
        %v302 = vld [vmem:[%s287 + $0x1c] sm:$0x1]
        %v303 = vld [vmem:[%s287 + $0x34] sm:$0x1]
        %v304 = vld [vmem:[%s287 + $0x4c] sm:$0x1]
        %v305 = vld [vmem:[%s287 + $0x64] sm:$0x1]
        %v306 = vld [vmem:[%s287 + $0x7c] sm:$0x1]
        %v307 = vld [vmem:[%s287 + $0x94] sm:$0x1]
        %v308 = vld [vmem:[%s287 + $0xac] sm:$0x1]
        %v309 = vld [vmem:[%s287 + $0xc4] sm:$0x1]
        %v310 = vld [vmem:[%s287 + $0xdc] sm:$0x1]
        %v311 = vld [vmem:[%s287 + $0xf4] sm:$0x1]
        %v312 = vld [vmem:[%s287 + $0x10c] sm:$0x1]
        %v313 = vld [vmem:[%s287 + $0x124] sm:$0x1]
        %v314 = vld [vmem:[%s287 + $0x13c] sm:$0x1]
        %v315 = vld [vmem:[%s287 + $0x154] sm:$0x1]
        %v316 = vld [vmem:[%s287 + $0x16c] sm:$0x1]
        %v317 = vld [vmem:[%s287 + $0x184] sm:$0x1]
        %v318 = vld [vmem:[%s287 + $0x19c] sm:$0x1]
        %v319 = vld [vmem:[%s287 + $0x1b4] sm:$0x1]
        %v320 = vld [vmem:[%s287 + $0x1cc] sm:$0x1]
        %v321 = vld [vmem:[%s287 + $0x1e4] sm:$0x1]
        %v322 = vld [vmem:[%s287 + $0x1fc] sm:$0x1]
        %v323 = vld [vmem:[%s287 + $0x13] sm:$0x1]
        %v324 = vld [vmem:[%s287 + $0x2b] sm:$0x1]
        %v325 = vld [vmem:[%s287 + $0x43] sm:$0x1]
        %v326 = vld [vmem:[%s287 + $0x5b] sm:$0x1]
        %v327 = vld [vmem:[%s287 + $0x73] sm:$0x1]
        %v328 = vld [vmem:[%s287 + $0x8b] sm:$0x1]
        %v329 = vld [vmem:[%s287 + $0xa3] sm:$0x1]
        %v330 = vld [vmem:[%s287 + $0xbb] sm:$0x1]
        %v331 = vld [vmem:[%s287 + $0xd3] sm:$0x1]
        %v332 = vld [vmem:[%s287 + $0xeb] sm:$0x1]
        %v333 = vld [vmem:[%s287 + $0x103] sm:$0x1]
        %v334 = vld [vmem:[%s287 + $0x11b] sm:$0x1]
        %v335 = vld [vmem:[%s287 + $0x133] sm:$0x1]
        %v336 = vld [vmem:[%s287 + $0x14b] sm:$0x1]
        %v337 = vld [vmem:[%s287 + $0x163] sm:$0x1]
        %v338 = vld [vmem:[%s287 + $0x17b] sm:$0x1]
        %v339 = vld [vmem:[%s287 + $0x193] sm:$0x1]
        %v340 = vld [vmem:[%s287 + $0x1ab] sm:$0x1]
        %v341 = vld [vmem:[%s287 + $0x1c3] sm:$0x1]
        %v342 = vld [vmem:[%s287 + $0x1db] sm:$0x1]
        %v343 = vld [vmem:[%s287 + $0x1f3] sm:$0x1]
        %v344 = vld [vmem:[%s287 + $0x20b] sm:$0x1]
        %345 = vst.msk [vmem:[%s287 + $0x1] sm:$0x1] %vm205, %v301
        %346 = vst.msk [vmem:[%s287 + $0x19] sm:$0x1] %vm205, %v302
        %347 = vst.msk [vmem:[%s287 + $0x31] sm:$0x1] %vm205, %v303
        %348 = vst.msk [vmem:[%s287 + $0x49] sm:$0x1] %vm205, %v304
        %349 = vst.msk [vmem:[%s287 + $0x61] sm:$0x1] %vm205, %v305
        %350 = vst.msk [vmem:[%s287 + $0x79] sm:$0x1] %vm205, %v306
        %351 = vst.msk [vmem:[%s287 + $0x91] sm:$0x1] %vm205, %v307
        %352 = vst.msk [vmem:[%s287 + $0xa9] sm:$0x1] %vm205, %v308
        %353 = vst.msk [vmem:[%s287 + $0xc1] sm:$0x1] %vm205, %v309
        %354 = vst.msk [vmem:[%s287 + $0xd9] sm:$0x1] %vm205, %v310
        %355 = vst.msk [vmem:[%s287 + $0xf1] sm:$0x1] %vm205, %v311
        %356 = vst.msk [vmem:[%s287 + $0x109] sm:$0x1] %vm205, %v312
        %357 = vst.msk [vmem:[%s287 + $0x121] sm:$0x1] %vm205, %v313
        %358 = vst.msk [vmem:[%s287 + $0x139] sm:$0x1] %vm205, %v314
        %359 = vst.msk [vmem:[%s287 + $0x151] sm:$0x1] %vm205, %v315
        %360 = vst.msk [vmem:[%s287 + $0x169] sm:$0x1] %vm205, %v316
        %361 = vst.msk [vmem:[%s287 + $0x181] sm:$0x1] %vm205, %v317
        %362 = vst.msk [vmem:[%s287 + $0x199] sm:$0x1] %vm205, %v318
        %363 = vst.msk [vmem:[%s287 + $0x1b1] sm:$0x1] %vm205, %v319
        %364 = vst.msk [vmem:[%s287 + $0x1c9] sm:$0x1] %vm205, %v320
        %365 = vst.msk [vmem:[%s287 + $0x1e1] sm:$0x1] %vm205, %v321
        %366 = vst.msk [vmem:[%s287 + $0x1f9] sm:$0x1] %vm205, %v322
        %367 = vst.msk [vmem:[%s287 + $0x14] sm:$0x1] %vm205, %v323
        %368 = vst.msk [vmem:[%s287 + $0x2c] sm:$0x1] %vm205, %v324
        %369 = vst.msk [vmem:[%s287 + $0x44] sm:$0x1] %vm205, %v325
        %370 = vst.msk [vmem:[%s287 + $0x5c] sm:$0x1] %vm205, %v326
        %371 = vst.msk [vmem:[%s287 + $0x74] sm:$0x1] %vm205, %v327
        %372 = vst.msk [vmem:[%s287 + $0x8c] sm:$0x1] %vm205, %v328
        %373 = vst.msk [vmem:[%s287 + $0xa4] sm:$0x1] %vm205, %v329
        %374 = vst.msk [vmem:[%s287 + $0xbc] sm:$0x1] %vm205, %v330
        %375 = vst.msk [vmem:[%s287 + $0xd4] sm:$0x1] %vm205, %v331
        %376 = vst.msk [vmem:[%s287 + $0xec] sm:$0x1] %vm205, %v332
        %377 = vst.msk [vmem:[%s287 + $0x104] sm:$0x1] %vm205, %v333
        %378 = vst.msk [vmem:[%s287 + $0x11c] sm:$0x1] %vm205, %v334
        %379 = vst.msk [vmem:[%s287 + $0x134] sm:$0x1] %vm205, %v335
        %380 = vst.msk [vmem:[%s287 + $0x14c] sm:$0x1] %vm205, %v336
        %381 = vst.msk [vmem:[%s287 + $0x164] sm:$0x1] %vm205, %v337
        %382 = vst.msk [vmem:[%s287 + $0x17c] sm:$0x1] %vm205, %v338
        %383 = vst.msk [vmem:[%s287 + $0x194] sm:$0x1] %vm205, %v339
        %384 = vst.msk [vmem:[%s287 + $0x1ac] sm:$0x1] %vm205, %v340
        %385 = vst.msk [vmem:[%s287 + $0x1c4] sm:$0x1] %vm205, %v341
        %386 = vst.msk [vmem:[%s287 + $0x1dc] sm:$0x1] %vm205, %v342
        %387 = vst.msk [vmem:[%s287 + $0x1f4] sm:$0x1] %vm205, %v343
        %388 = vst.msk [vmem:[%s287 + $0x20c] sm:$0x1] %vm205, %v344
        %389 = vst.msk [vmem:[%s287 + $0x2] sm:$0x1] %vm205, %v301
        %390 = vst.msk [vmem:[%s287 + $0x1a] sm:$0x1] %vm205, %v302
        %391 = vst.msk [vmem:[%s287 + $0x32] sm:$0x1] %vm205, %v303
        %392 = vst.msk [vmem:[%s287 + $0x4a] sm:$0x1] %vm205, %v304
        %393 = vst.msk [vmem:[%s287 + $0x62] sm:$0x1] %vm205, %v305
        %394 = vst.msk [vmem:[%s287 + $0x7a] sm:$0x1] %vm205, %v306
        %395 = vst.msk [vmem:[%s287 + $0x92] sm:$0x1] %vm205, %v307
        %396 = vst.msk [vmem:[%s287 + $0xaa] sm:$0x1] %vm205, %v308
        %397 = vst.msk [vmem:[%s287 + $0xc2] sm:$0x1] %vm205, %v309
        %398 = vst.msk [vmem:[%s287 + $0xda] sm:$0x1] %vm205, %v310
        %399 = vst.msk [vmem:[%s287 + $0xf2] sm:$0x1] %vm205, %v311
        %400 = vst.msk [vmem:[%s287 + $0x10a] sm:$0x1] %vm205, %v312
        %401 = vst.msk [vmem:[%s287 + $0x122] sm:$0x1] %vm205, %v313
        %402 = vst.msk [vmem:[%s287 + $0x13a] sm:$0x1] %vm205, %v314
        %403 = vst.msk [vmem:[%s287 + $0x152] sm:$0x1] %vm205, %v315
        %404 = vst.msk [vmem:[%s287 + $0x16a] sm:$0x1] %vm205, %v316
        %405 = vst.msk [vmem:[%s287 + $0x182] sm:$0x1] %vm205, %v317
        %406 = vst.msk [vmem:[%s287 + $0x19a] sm:$0x1] %vm205, %v318
        %407 = vst.msk [vmem:[%s287 + $0x1b2] sm:$0x1] %vm205, %v319
        %408 = vst.msk [vmem:[%s287 + $0x1ca] sm:$0x1] %vm205, %v320
        %409 = vst.msk [vmem:[%s287 + $0x1e2] sm:$0x1] %vm205, %v321
        %410 = vst.msk [vmem:[%s287 + $0x1fa] sm:$0x1] %vm205, %v322
        %411 = vst.msk [vmem:[%s287 + $0x15] sm:$0x1] %vm205, %v323
        %412 = vst.msk [vmem:[%s287 + $0x2d] sm:$0x1] %vm205, %v324
        %413 = vst.msk [vmem:[%s287 + $0x45] sm:$0x1] %vm205, %v325
        %414 = vst.msk [vmem:[%s287 + $0x5d] sm:$0x1] %vm205, %v326
        %415 = vst.msk [vmem:[%s287 + $0x75] sm:$0x1] %vm205, %v327
        %416 = vst.msk [vmem:[%s287 + $0x8d] sm:$0x1] %vm205, %v328
        %417 = vst.msk [vmem:[%s287 + $0xa5] sm:$0x1] %vm205, %v329
        %418 = vst.msk [vmem:[%s287 + $0xbd] sm:$0x1] %vm205, %v330
        %419 = vst.msk [vmem:[%s287 + $0xd5] sm:$0x1] %vm205, %v331
        %420 = vst.msk [vmem:[%s287 + $0xed] sm:$0x1] %vm205, %v332
        %421 = vst.msk [vmem:[%s287 + $0x105] sm:$0x1] %vm205, %v333
        %422 = vst.msk [vmem:[%s287 + $0x11d] sm:$0x1] %vm205, %v334
        %423 = vst.msk [vmem:[%s287 + $0x135] sm:$0x1] %vm205, %v335
        %424 = vst.msk [vmem:[%s287 + $0x14d] sm:$0x1] %vm205, %v336
        %425 = vst.msk [vmem:[%s287 + $0x165] sm:$0x1] %vm205, %v337
        %426 = vst.msk [vmem:[%s287 + $0x17d] sm:$0x1] %vm205, %v338
        %427 = vst.msk [vmem:[%s287 + $0x195] sm:$0x1] %vm205, %v339
        %428 = vst.msk [vmem:[%s287 + $0x1ad] sm:$0x1] %vm205, %v340
        %429 = vst.msk [vmem:[%s287 + $0x1c5] sm:$0x1] %vm205, %v341
        %430 = vst.msk [vmem:[%s287 + $0x1dd] sm:$0x1] %vm205, %v342
        %431 = vst.msk [vmem:[%s287 + $0x1f5] sm:$0x1] %vm205, %v343
        %432 = vst.msk [vmem:[%s287 + $0x20d] sm:$0x1] %vm205, %v344
        %433 = vst.msk [vmem:[%s287 + $0x3] sm:$0x1] %vm205, %v301
        %434 = vst.msk [vmem:[%s287 + $0x1b] sm:$0x1] %vm205, %v302
        %435 = vst.msk [vmem:[%s287 + $0x33] sm:$0x1] %vm205, %v303
        %436 = vst.msk [vmem:[%s287 + $0x4b] sm:$0x1] %vm205, %v304
        %437 = vst.msk [vmem:[%s287 + $0x63] sm:$0x1] %vm205, %v305
        %438 = vst.msk [vmem:[%s287 + $0x7b] sm:$0x1] %vm205, %v306
        %439 = vst.msk [vmem:[%s287 + $0x93] sm:$0x1] %vm205, %v307
        %440 = vst.msk [vmem:[%s287 + $0xab] sm:$0x1] %vm205, %v308
        %441 = vst.msk [vmem:[%s287 + $0xc3] sm:$0x1] %vm205, %v309
        %442 = vst.msk [vmem:[%s287 + $0xdb] sm:$0x1] %vm205, %v310
        %443 = vst.msk [vmem:[%s287 + $0xf3] sm:$0x1] %vm205, %v311
        %444 = vst.msk [vmem:[%s287 + $0x10b] sm:$0x1] %vm205, %v312
        %445 = vst.msk [vmem:[%s287 + $0x123] sm:$0x1] %vm205, %v313
        %446 = vst.msk [vmem:[%s287 + $0x13b] sm:$0x1] %vm205, %v314
        %447 = vst.msk [vmem:[%s287 + $0x153] sm:$0x1] %vm205, %v315
        %448 = vst.msk [vmem:[%s287 + $0x16b] sm:$0x1] %vm205, %v316
        %449 = vst.msk [vmem:[%s287 + $0x183] sm:$0x1] %vm205, %v317
        %450 = vst.msk [vmem:[%s287 + $0x19b] sm:$0x1] %vm205, %v318
        %451 = vst.msk [vmem:[%s287 + $0x1b3] sm:$0x1] %vm205, %v319
        %452 = vst.msk [vmem:[%s287 + $0x1cb] sm:$0x1] %vm205, %v320
        %453 = vst.msk [vmem:[%s287 + $0x1e3] sm:$0x1] %vm205, %v321
        %454 = vst.msk [vmem:[%s287 + $0x1fb] sm:$0x1] %vm205, %v322
        %455 = vst.msk [vmem:[%s287 + $0x16] sm:$0x1] %vm205, %v323
        %456 = vst.msk [vmem:[%s287 + $0x2e] sm:$0x1] %vm205, %v324
        %457 = vst.msk [vmem:[%s287 + $0x46] sm:$0x1] %vm205, %v325
        %458 = vst.msk [vmem:[%s287 + $0x5e] sm:$0x1] %vm205, %v326
        %459 = vst.msk [vmem:[%s287 + $0x76] sm:$0x1] %vm205, %v327
        %460 = vst.msk [vmem:[%s287 + $0x8e] sm:$0x1] %vm205, %v328
        %461 = vst.msk [vmem:[%s287 + $0xa6] sm:$0x1] %vm205, %v329
        %462 = vst.msk [vmem:[%s287 + $0xbe] sm:$0x1] %vm205, %v330
        %463 = vst.msk [vmem:[%s287 + $0xd6] sm:$0x1] %vm205, %v331
        %464 = vst.msk [vmem:[%s287 + $0xee] sm:$0x1] %vm205, %v332
        %465 = vst.msk [vmem:[%s287 + $0x106] sm:$0x1] %vm205, %v333
        %466 = vst.msk [vmem:[%s287 + $0x11e] sm:$0x1] %vm205, %v334
        %467 = vst.msk [vmem:[%s287 + $0x136] sm:$0x1] %vm205, %v335
        %468 = vst.msk [vmem:[%s287 + $0x14e] sm:$0x1] %vm205, %v336
        %469 = vst.msk [vmem:[%s287 + $0x166] sm:$0x1] %vm205, %v337
        %470 = vst.msk [vmem:[%s287 + $0x17e] sm:$0x1] %vm205, %v338
        %471 = vst.msk [vmem:[%s287 + $0x196] sm:$0x1] %vm205, %v339
        %472 = vst.msk [vmem:[%s287 + $0x1ae] sm:$0x1] %vm205, %v340
        %473 = vst.msk [vmem:[%s287 + $0x1c6] sm:$0x1] %vm205, %v341
        %474 = vst.msk [vmem:[%s287 + $0x1de] sm:$0x1] %vm205, %v342
        %475 = vst.msk [vmem:[%s287 + $0x1f6] sm:$0x1] %vm205, %v343
        %476 = vst.msk [vmem:[%s287 + $0x20e] sm:$0x1] %vm205, %v344
        %s477 = smul.u32 %s21, 128
        %s478 = sld [smem:[#allocation4 + %s477]]
        %s479 = sadd.s32 %s477, 1
        %s480 = sld [smem:[#allocation4 + %s479]]
        %s481 = sld [smem:[#allocation5 + %s477]]
        %s482 = sld [smem:[#allocation5 + %s479]]
        %s483 = smul.u32 %s478, 24
        %s484 = sadd.s32 %s480, %s483
        %s485 = scalar_lea.vmem [#allocation2], %s484
        %v486 = vld [vmem:[%s485] sm:$0xff]
        %v487 = vld [vmem:[%s485 + $0x8] sm:$0xff]
        %v488 = vld [vmem:[%s485 + $0x10] sm:$0x1]
        %v489 = vld [vmem:[%s485 + $0x18] sm:$0xff]
        %v490 = vld [vmem:[%s485 + $0x20] sm:$0xff]
        %v491 = vld [vmem:[%s485 + $0x28] sm:$0x1]
        %v492 = vld [vmem:[%s485 + $0x30] sm:$0xff]
        %v493 = vld [vmem:[%s485 + $0x38] sm:$0xff]
        %v494 = vld [vmem:[%s485 + $0x40] sm:$0x1]
        %v495 = vld [vmem:[%s485 + $0x48] sm:$0xff]
        %v496 = vld [vmem:[%s485 + $0x50] sm:$0xff]
        %v497 = vld [vmem:[%s485 + $0x58] sm:$0x1]
        %v498 = vld [vmem:[%s485 + $0x60] sm:$0xff]
        %v499 = vld [vmem:[%s485 + $0x68] sm:$0xff]
        %v500 = vld [vmem:[%s485 + $0x70] sm:$0x1]
        %v501 = vld [vmem:[%s485 + $0x78] sm:$0xff]
        %v502 = vld [vmem:[%s485 + $0x80] sm:$0xff]
        %v503 = vld [vmem:[%s485 + $0x88] sm:$0x1]
        %v504 = vld [vmem:[%s485 + $0x90] sm:$0xff]
        %v505 = vld [vmem:[%s485 + $0x98] sm:$0xff]
        %v506 = vld [vmem:[%s485 + $0xa0] sm:$0x1]
        %v507 = vld [vmem:[%s485 + $0xa8] sm:$0xff]
        %v508 = vld [vmem:[%s485 + $0xb0] sm:$0xff]
        %v509 = vld [vmem:[%s485 + $0xb8] sm:$0x1]
        %v510 = vld [vmem:[%s485 + $0xc0] sm:$0xff]
        %v511 = vld [vmem:[%s485 + $0xc8] sm:$0xff]
        %v512 = vld [vmem:[%s485 + $0xd0] sm:$0x1]
        %v513 = vld [vmem:[%s485 + $0xd8] sm:$0xff]
        %v514 = vld [vmem:[%s485 + $0xe0] sm:$0xff]
        %v515 = vld [vmem:[%s485 + $0xe8] sm:$0x1]
        %v516 = vld [vmem:[%s485 + $0xf0] sm:$0xff]
        %v517 = vld [vmem:[%s485 + $0xf8] sm:$0xff]
        %v518 = vld [vmem:[%s485 + $0x100] sm:$0x1]
        %v519 = vld [vmem:[%s485 + $0x108] sm:$0xff]
        %v520 = vld [vmem:[%s485 + $0x110] sm:$0xff]
        %v521 = vld [vmem:[%s485 + $0x118] sm:$0x1]
        %v522 = vld [vmem:[%s485 + $0x120] sm:$0xff]
        %v523 = vld [vmem:[%s485 + $0x128] sm:$0xff]
        %v524 = vld [vmem:[%s485 + $0x130] sm:$0x1]
        %v525 = vld [vmem:[%s485 + $0x138] sm:$0xff]
        %v526 = vld [vmem:[%s485 + $0x140] sm:$0xff]
        %v527 = vld [vmem:[%s485 + $0x148] sm:$0x1]
        %v528 = vld [vmem:[%s485 + $0x150] sm:$0xff]
        %v529 = vld [vmem:[%s485 + $0x158] sm:$0xff]
        %v530 = vld [vmem:[%s485 + $0x160] sm:$0x1]
        %v531 = vld [vmem:[%s485 + $0x168] sm:$0xff]
        %v532 = vld [vmem:[%s485 + $0x170] sm:$0xff]
        %v533 = vld [vmem:[%s485 + $0x178] sm:$0x1]
        %v534 = vld [vmem:[%s485 + $0x180] sm:$0xff]
        %v535 = vld [vmem:[%s485 + $0x188] sm:$0xff]
        %v536 = vld [vmem:[%s485 + $0x190] sm:$0x1]
        %vm571 = vcmask 1040384
        %v572 = vrot.slane %v486, 7
        %v573 = vrot.slane %v487, 7
        %v574 = vsel %vm571, %v572, %v573
        %v575 = vrot.slane %v489, 7
        %v576 = vrot.slane %v490, 7
        %v577 = vsel %vm571, %v575, %v576
        %v578 = vrot.slane %v492, 7
        %v579 = vrot.slane %v493, 7
        %v580 = vsel %vm571, %v578, %v579
        %v581 = vrot.slane %v495, 7
        %v582 = vrot.slane %v496, 7
        %v583 = vsel %vm571, %v581, %v582
        %v584 = vrot.slane %v498, 7
        %v585 = vrot.slane %v499, 7
        %v586 = vsel %vm571, %v584, %v585
        %v587 = vrot.slane %v501, 7
        %v588 = vrot.slane %v502, 7
        %v589 = vsel %vm571, %v587, %v588
        %v590 = vrot.slane %v504, 7
        %v591 = vrot.slane %v505, 7
        %v592 = vsel %vm571, %v590, %v591
        %v593 = vrot.slane %v507, 7
        %v594 = vrot.slane %v508, 7
        %v595 = vsel %vm571, %v593, %v594
        %v596 = vrot.slane %v510, 7
        %v597 = vrot.slane %v511, 7
        %v598 = vsel %vm571, %v596, %v597
        %v599 = vrot.slane %v513, 7
        %v600 = vrot.slane %v514, 7
        %v601 = vsel %vm571, %v599, %v600
        %v602 = vrot.slane %v516, 7
        %v603 = vrot.slane %v517, 7
        %v604 = vsel %vm571, %v602, %v603
        %v605 = vrot.slane %v519, 7
        %v606 = vrot.slane %v520, 7
        %v607 = vsel %vm571, %v605, %v606
        %v608 = vrot.slane %v522, 7
        %v609 = vrot.slane %v523, 7
        %v610 = vsel %vm571, %v608, %v609
        %v611 = vrot.slane %v525, 7
        %v612 = vrot.slane %v526, 7
        %v613 = vsel %vm571, %v611, %v612
        %v614 = vrot.slane %v528, 7
        %v615 = vrot.slane %v529, 7
        %v616 = vsel %vm571, %v614, %v615
        %v617 = vrot.slane %v531, 7
        %v618 = vrot.slane %v532, 7
        %v619 = vsel %vm571, %v617, %v618
        %v620 = vrot.slane %v534, 7
        %v621 = vrot.slane %v535, 7
        %v622 = vsel %vm571, %v620, %v621
        %v674 = vsub.f32 %v486, %v572
        %v675 = vsub.f32 %v487, %v574
        %v676 = vsub.f32 %v488, %v573
        %v677 = vsub.f32 %v489, %v575
        %v678 = vsub.f32 %v490, %v577
        %v679 = vsub.f32 %v491, %v576
        %v680 = vsub.f32 %v492, %v578
        %v681 = vsub.f32 %v493, %v580
        %v682 = vsub.f32 %v494, %v579
        %v683 = vsub.f32 %v495, %v581
        %v684 = vsub.f32 %v496, %v583
        %v685 = vsub.f32 %v497, %v582
        %v686 = vsub.f32 %v498, %v584
        %v687 = vsub.f32 %v499, %v586
        %v688 = vsub.f32 %v500, %v585
        %v689 = vsub.f32 %v501, %v587
        %v690 = vsub.f32 %v502, %v589
        %v691 = vsub.f32 %v503, %v588
        %v692 = vsub.f32 %v504, %v590
        %v693 = vsub.f32 %v505, %v592
        %v694 = vsub.f32 %v506, %v591
        %v695 = vsub.f32 %v507, %v593
        %v696 = vsub.f32 %v508, %v595
        %v697 = vsub.f32 %v509, %v594
        %v698 = vsub.f32 %v510, %v596
        %v699 = vsub.f32 %v511, %v598
        %v700 = vsub.f32 %v512, %v597
        %v701 = vsub.f32 %v513, %v599
        %v702 = vsub.f32 %v514, %v601
        %v703 = vsub.f32 %v515, %v600
        %v704 = vsub.f32 %v516, %v602
        %v705 = vsub.f32 %v517, %v604
        %v706 = vsub.f32 %v518, %v603
        %v707 = vsub.f32 %v519, %v605
        %v708 = vsub.f32 %v520, %v607
        %v709 = vsub.f32 %v521, %v606
        %v710 = vsub.f32 %v522, %v608
        %v711 = vsub.f32 %v523, %v610
        %v712 = vsub.f32 %v524, %v609
        %v713 = vsub.f32 %v525, %v611
        %v714 = vsub.f32 %v526, %v613
        %v715 = vsub.f32 %v527, %v612
        %v716 = vsub.f32 %v528, %v614
        %v717 = vsub.f32 %v529, %v616
        %v718 = vsub.f32 %v530, %v615
        %v719 = vsub.f32 %v531, %v617
        %v720 = vsub.f32 %v532, %v619
        %v721 = vsub.f32 %v533, %v618
        %v722 = vsub.f32 %v534, %v620
        %v723 = vsub.f32 %v535, %v622
        %v724 = vsub.f32 %v536, %v621
        %v725 = vstv %s482
        %v726 = vmul.f32 %v725, %v674
        %v727 = vmul.f32 %v725, %v675
        %v728 = vmul.f32 %v725, %v676
        %v729 = vmul.f32 %v725, %v677
        %v730 = vmul.f32 %v725, %v678
        %v731 = vmul.f32 %v725, %v679
        %v732 = vmul.f32 %v725, %v680
        %v733 = vmul.f32 %v725, %v681
        %v734 = vmul.f32 %v725, %v682
        %v735 = vmul.f32 %v725, %v683
        %v736 = vmul.f32 %v725, %v684
        %v737 = vmul.f32 %v725, %v685
        %v738 = vmul.f32 %v725, %v686
        %v739 = vmul.f32 %v725, %v687
        %v740 = vmul.f32 %v725, %v688
        %v741 = vmul.f32 %v725, %v689
        %v742 = vmul.f32 %v725, %v690
        %v743 = vmul.f32 %v725, %v691
        %v744 = vmul.f32 %v725, %v692
        %v745 = vmul.f32 %v725, %v693
        %v746 = vmul.f32 %v725, %v694
        %v747 = vmul.f32 %v725, %v695
        %v748 = vmul.f32 %v725, %v696
        %v749 = vmul.f32 %v725, %v697
        %v750 = vmul.f32 %v725, %v698
        %v751 = vmul.f32 %v725, %v699
        %v752 = vmul.f32 %v725, %v700
        %v753 = vmul.f32 %v725, %v701
        %v754 = vmul.f32 %v725, %v702
        %v755 = vmul.f32 %v725, %v703
        %v756 = vmul.f32 %v725, %v704
        %v757 = vmul.f32 %v725, %v705
        %v758 = vmul.f32 %v725, %v706
        %v759 = vmul.f32 %v725, %v707
        %v760 = vmul.f32 %v725, %v708
        %v761 = vmul.f32 %v725, %v709
        %v762 = vmul.f32 %v725, %v710
        %v763 = vmul.f32 %v725, %v711
        %v764 = vmul.f32 %v725, %v712
        %v765 = vmul.f32 %v725, %v713
        %v766 = vmul.f32 %v725, %v714
        %v767 = vmul.f32 %v725, %v715
        %v768 = vmul.f32 %v725, %v716
        %v769 = vmul.f32 %v725, %v717
        %v770 = vmul.f32 %v725, %v718
        %v771 = vmul.f32 %v725, %v719
        %v772 = vmul.f32 %v725, %v720
        %v773 = vmul.f32 %v725, %v721
        %v774 = vmul.f32 %v725, %v722
        %v775 = vmul.f32 %v725, %v723
        %v776 = vmul.f32 %v725, %v724
        %vm828 = vcmask 1046528
        %v829 = vrot.slane %v726, 1
        %v830 = vrot.slane %v727, 1
        %v831 = vsel %vm828, %v829, %v830
        %v832 = vrot.slane %v728, 1
        %v833 = vsel %vm828, %v830, %v832
        %v834 = vrot.slane %v729, 1
        %v835 = vrot.slane %v730, 1
        %v836 = vsel %vm828, %v834, %v835
        %v837 = vrot.slane %v731, 1
        %v838 = vsel %vm828, %v835, %v837
        %v839 = vrot.slane %v732, 1
        %v840 = vrot.slane %v733, 1
        %v841 = vsel %vm828, %v839, %v840
        %v842 = vrot.slane %v734, 1
        %v843 = vsel %vm828, %v840, %v842
        %v844 = vrot.slane %v735, 1
        %v845 = vrot.slane %v736, 1
        %v846 = vsel %vm828, %v844, %v845
        %v847 = vrot.slane %v737, 1
        %v848 = vsel %vm828, %v845, %v847
        %v849 = vrot.slane %v738, 1
        %v850 = vrot.slane %v739, 1
        %v851 = vsel %vm828, %v849, %v850
        %v852 = vrot.slane %v740, 1
        %v853 = vsel %vm828, %v850, %v852
        %v854 = vrot.slane %v741, 1
        %v855 = vrot.slane %v742, 1
        %v856 = vsel %vm828, %v854, %v855
        %v857 = vrot.slane %v743, 1
        %v858 = vsel %vm828, %v855, %v857
        %v859 = vrot.slane %v744, 1
        %v860 = vrot.slane %v745, 1
        %v861 = vsel %vm828, %v859, %v860
        %v862 = vrot.slane %v746, 1
        %v863 = vsel %vm828, %v860, %v862
        %v864 = vrot.slane %v747, 1
        %v865 = vrot.slane %v748, 1
        %v866 = vsel %vm828, %v864, %v865
        %v867 = vrot.slane %v749, 1
        %v868 = vsel %vm828, %v865, %v867
        %v869 = vrot.slane %v750, 1
        %v870 = vrot.slane %v751, 1
        %v871 = vsel %vm828, %v869, %v870
        %v872 = vrot.slane %v752, 1
        %v873 = vsel %vm828, %v870, %v872
        %v874 = vrot.slane %v753, 1
        %v875 = vrot.slane %v754, 1
        %v876 = vsel %vm828, %v874, %v875
        %v877 = vrot.slane %v755, 1
        %v878 = vsel %vm828, %v875, %v877
        %v879 = vrot.slane %v756, 1
        %v880 = vrot.slane %v757, 1
        %v881 = vsel %vm828, %v879, %v880
        %v882 = vrot.slane %v758, 1
        %v883 = vsel %vm828, %v880, %v882
        %v884 = vrot.slane %v759, 1
        %v885 = vrot.slane %v760, 1
        %v886 = vsel %vm828, %v884, %v885
        %v887 = vrot.slane %v761, 1
        %v888 = vsel %vm828, %v885, %v887
        %v889 = vrot.slane %v762, 1
        %v890 = vrot.slane %v763, 1
        %v891 = vsel %vm828, %v889, %v890
        %v892 = vrot.slane %v764, 1
        %v893 = vsel %vm828, %v890, %v892
        %v894 = vrot.slane %v765, 1
        %v895 = vrot.slane %v766, 1
        %v896 = vsel %vm828, %v894, %v895
        %v897 = vrot.slane %v767, 1
        %v898 = vsel %vm828, %v895, %v897
        %v899 = vrot.slane %v768, 1
        %v900 = vrot.slane %v769, 1
        %v901 = vsel %vm828, %v899, %v900
        %v902 = vrot.slane %v770, 1
        %v903 = vsel %vm828, %v900, %v902
        %v904 = vrot.slane %v771, 1
        %v905 = vrot.slane %v772, 1
        %v906 = vsel %vm828, %v904, %v905
        %v907 = vrot.slane %v773, 1
        %v908 = vsel %vm828, %v905, %v907
        %v909 = vrot.slane %v774, 1
        %v910 = vrot.slane %v775, 1
        %v911 = vsel %vm828, %v909, %v910
        %v912 = vrot.slane %v776, 1
        %v913 = vsel %vm828, %v910, %v912
        %v948 = vadd.f32 %v486, %v831
        %v949 = vadd.f32 %v487, %v833
        %v950 = vadd.f32 %v489, %v836
        %v951 = vadd.f32 %v490, %v838
        %v952 = vadd.f32 %v492, %v841
        %v953 = vadd.f32 %v493, %v843
        %v954 = vadd.f32 %v495, %v846
        %v955 = vadd.f32 %v496, %v848
        %v956 = vadd.f32 %v498, %v851
        %v957 = vadd.f32 %v499, %v853
        %v958 = vadd.f32 %v501, %v856
        %v959 = vadd.f32 %v502, %v858
        %v960 = vadd.f32 %v504, %v861
        %v961 = vadd.f32 %v505, %v863
        %v962 = vadd.f32 %v507, %v866
        %v963 = vadd.f32 %v508, %v868
        %v964 = vadd.f32 %v510, %v871
        %v965 = vadd.f32 %v511, %v873
        %v966 = vadd.f32 %v513, %v876
        %v967 = vadd.f32 %v514, %v878
        %v968 = vadd.f32 %v516, %v881
        %v969 = vadd.f32 %v517, %v883
        %v970 = vadd.f32 %v519, %v886
        %v971 = vadd.f32 %v520, %v888
        %v972 = vadd.f32 %v522, %v891
        %v973 = vadd.f32 %v523, %v893
        %v974 = vadd.f32 %v525, %v896
        %v975 = vadd.f32 %v526, %v898
        %v976 = vadd.f32 %v528, %v901
        %v977 = vadd.f32 %v529, %v903
        %v978 = vadd.f32 %v531, %v906
        %v979 = vadd.f32 %v532, %v908
        %v980 = vadd.f32 %v534, %v911
        %v981 = vadd.f32 %v535, %v913
        %v982 = vsub.f32 %v950, %v948
        %v983 = vsub.f32 %v951, %v949
        %v984 = vsub.f32 %v952, %v950
        %v985 = vsub.f32 %v953, %v951
        %v986 = vsub.f32 %v954, %v952
        %v987 = vsub.f32 %v955, %v953
        %v988 = vsub.f32 %v956, %v954
        %v989 = vsub.f32 %v957, %v955
        %v990 = vsub.f32 %v958, %v956
        %v991 = vsub.f32 %v959, %v957
        %v992 = vsub.f32 %v960, %v958
        %v993 = vsub.f32 %v961, %v959
        %v994 = vsub.f32 %v962, %v960
        %v995 = vsub.f32 %v963, %v961
        %v996 = vsub.f32 %v964, %v962
        %v997 = vsub.f32 %v965, %v963
        %v998 = vsub.f32 %v966, %v964
        %v999 = vsub.f32 %v967, %v965
        %v1000 = vsub.f32 %v968, %v966
        %v1001 = vsub.f32 %v969, %v967
        %v1002 = vsub.f32 %v970, %v968
        %v1003 = vsub.f32 %v971, %v969
        %v1004 = vsub.f32 %v972, %v970
        %v1005 = vsub.f32 %v973, %v971
        %v1006 = vsub.f32 %v974, %v972
        %v1007 = vsub.f32 %v975, %v973
        %v1008 = vsub.f32 %v976, %v974
        %v1009 = vsub.f32 %v977, %v975
        %v1010 = vsub.f32 %v978, %v976
        %v1011 = vsub.f32 %v979, %v977
        %v1012 = vsub.f32 %v980, %v978
        %v1013 = vsub.f32 %v981, %v979
        %v1014 = vstv %s481
        %v1015 = vmul.f32 %v1014, %v982
        %v1016 = vmul.f32 %v1014, %v983
        %v1017 = vmul.f32 %v1014, %v984
        %v1018 = vmul.f32 %v1014, %v985
        %v1019 = vmul.f32 %v1014, %v986
        %v1020 = vmul.f32 %v1014, %v987
        %v1021 = vmul.f32 %v1014, %v988
        %v1022 = vmul.f32 %v1014, %v989
        %v1023 = vmul.f32 %v1014, %v990
        %v1024 = vmul.f32 %v1014, %v991
        %v1025 = vmul.f32 %v1014, %v992
        %v1026 = vmul.f32 %v1014, %v993
        %v1027 = vmul.f32 %v1014, %v994
        %v1028 = vmul.f32 %v1014, %v995
        %v1029 = vmul.f32 %v1014, %v996
        %v1030 = vmul.f32 %v1014, %v997
        %v1031 = vmul.f32 %v1014, %v998
        %v1032 = vmul.f32 %v1014, %v999
        %v1033 = vmul.f32 %v1014, %v1000
        %v1034 = vmul.f32 %v1014, %v1001
        %v1035 = vmul.f32 %v1014, %v1002
        %v1036 = vmul.f32 %v1014, %v1003
        %v1037 = vmul.f32 %v1014, %v1004
        %v1038 = vmul.f32 %v1014, %v1005
        %v1039 = vmul.f32 %v1014, %v1006
        %v1040 = vmul.f32 %v1014, %v1007
        %v1041 = vmul.f32 %v1014, %v1008
        %v1042 = vmul.f32 %v1014, %v1009
        %v1043 = vmul.f32 %v1014, %v1010
        %v1044 = vmul.f32 %v1014, %v1011
        %v1045 = vmul.f32 %v1014, %v1012
        %v1046 = vmul.f32 %v1014, %v1013
        %v1047 = vadd.f32 %v948, %v1015
        %v1048 = vadd.f32 %v949, %v1016
        %v1049 = vadd.f32 %v950, %v1017
        %v1050 = vadd.f32 %v951, %v1018
        %v1051 = vadd.f32 %v952, %v1019
        %v1052 = vadd.f32 %v953, %v1020
        %v1053 = vadd.f32 %v954, %v1021
        %v1054 = vadd.f32 %v955, %v1022
        %v1055 = vadd.f32 %v956, %v1023
        %v1056 = vadd.f32 %v957, %v1024
        %v1057 = vadd.f32 %v958, %v1025
        %v1058 = vadd.f32 %v959, %v1026
        %v1059 = vadd.f32 %v960, %v1027
        %v1060 = vadd.f32 %v961, %v1028
        %v1061 = vadd.f32 %v962, %v1029
        %v1062 = vadd.f32 %v963, %v1030
        %v1063 = vadd.f32 %v964, %v1031
        %v1064 = vadd.f32 %v965, %v1032
        %v1065 = vadd.f32 %v966, %v1033
        %v1066 = vadd.f32 %v967, %v1034
        %v1067 = vadd.f32 %v968, %v1035
        %v1068 = vadd.f32 %v969, %v1036
        %v1069 = vadd.f32 %v970, %v1037
        %v1070 = vadd.f32 %v971, %v1038
        %v1071 = vadd.f32 %v972, %v1039
        %v1072 = vadd.f32 %v973, %v1040
        %v1073 = vadd.f32 %v974, %v1041
        %v1074 = vadd.f32 %v975, %v1042
        %v1075 = vadd.f32 %v976, %v1043
        %v1076 = vadd.f32 %v977, %v1044
        %v1077 = vadd.f32 %v978, %v1045
        %v1078 = vadd.f32 %v979, %v1046
        %1079 = vst.msk [vmem:[%s164] sm:$0xff] %vm197, %v1047
        %1080 = vst.msk [vmem:[%s164 + $0x8] sm:$0xff] %vm197, %v1048
        %1081 = vst.msk [vmem:[%s164 + $0x10] sm:$0xff] %vm197, %v1049
        %1082 = vst.msk [vmem:[%s164 + $0x18] sm:$0xff] %vm197, %v1050
        %1083 = vst.msk [vmem:[%s164 + $0x20] sm:$0xff] %vm197, %v1051
        %1084 = vst.msk [vmem:[%s164 + $0x28] sm:$0xff] %vm197, %v1052
        %1085 = vst.msk [vmem:[%s164 + $0x30] sm:$0xff] %vm197, %v1053
        %1086 = vst.msk [vmem:[%s164 + $0x38] sm:$0xff] %vm197, %v1054
        %1087 = vst.msk [vmem:[%s164 + $0x40] sm:$0xff] %vm197, %v1055
        %1088 = vst.msk [vmem:[%s164 + $0x48] sm:$0xff] %vm197, %v1056
        %1089 = vst.msk [vmem:[%s164 + $0x50] sm:$0xff] %vm197, %v1057
        %1090 = vst.msk [vmem:[%s164 + $0x58] sm:$0xff] %vm197, %v1058
        %1091 = vst.msk [vmem:[%s164 + $0x60] sm:$0xff] %vm197, %v1059
        %1092 = vst.msk [vmem:[%s164 + $0x68] sm:$0xff] %vm197, %v1060
        %1093 = vst.msk [vmem:[%s164 + $0x70] sm:$0xff] %vm197, %v1061
        %1094 = vst.msk [vmem:[%s164 + $0x78] sm:$0xff] %vm197, %v1062
        %1095 = vst.msk [vmem:[%s164 + $0x80] sm:$0xff] %vm197, %v1063
        %1096 = vst.msk [vmem:[%s164 + $0x88] sm:$0xff] %vm197, %v1064
        %1097 = vst.msk [vmem:[%s164 + $0x90] sm:$0xff] %vm197, %v1065
        %1098 = vst.msk [vmem:[%s164 + $0x98] sm:$0xff] %vm197, %v1066
        %1099 = vst.msk [vmem:[%s164 + $0xa0] sm:$0xff] %vm197, %v1067
        %1100 = vst.msk [vmem:[%s164 + $0xa8] sm:$0xff] %vm197, %v1068
        %1101 = vst.msk [vmem:[%s164 + $0xb0] sm:$0xff] %vm197, %v1069
        %1102 = vst.msk [vmem:[%s164 + $0xb8] sm:$0xff] %vm197, %v1070
        %1103 = vst.msk [vmem:[%s164 + $0xc0] sm:$0xff] %vm197, %v1071
        %1104 = vst.msk [vmem:[%s164 + $0xc8] sm:$0xff] %vm197, %v1072
        %1105 = vst.msk [vmem:[%s164 + $0xd0] sm:$0xff] %vm197, %v1073
        %1106 = vst.msk [vmem:[%s164 + $0xd8] sm:$0xff] %vm197, %v1074
        %1107 = vst.msk [vmem:[%s164 + $0xe0] sm:$0xff] %vm197, %v1075
        %1108 = vst.msk [vmem:[%s164 + $0xe8] sm:$0xff] %vm197, %v1076
        %1109 = vst.msk [vmem:[%s164 + $0xf0] sm:$0xff] %vm197, %v1077
        %1110 = vst.msk [vmem:[%s164 + $0xf8] sm:$0xff] %vm197, %v1078
        %p1111 = scmp.lt.s32.totalorder %s21, 1
        %s1112 = scalar_select %p1111, %s21, 1
        %s1113 = smul.addr %s1112, 32
        %s1114 = smul.addr %s1113, 8
        %s1115 = scalar_lea.vmem %s3, %s1114
        // Predicated region
        $region33: #{tpu_custom_call.1} parent=27 // pred_check
          %p1116 = pneg %p86
        $region34: #{tpu_custom_call.1} parent=27 // pred_check_branch
          %1118 = sbr.rel (%p1116) target = $region36
        $region35: #{tpu_custom_call.1} parent=27 // pred_region
          _
        $region36: #{tpu_custom_call.1} parent=27 // pred_fallthru
          _
      $region28: #{tpu_custom_call.1} parent=5 // pred_fallthru
        _
      %p1119 = scmp.le.s32.totalorder 2, %s16
      // Predicated region
      $region37: #{tpu_custom_call.1} parent=5 // pred_check
        %p1120 = pneg %p1119
      $region38: #{tpu_custom_call.1} parent=5 // pred_check_branch
        %1122 = sbr.rel (%p1120) target = $region40
      $region39: #{tpu_custom_call.1} parent=5 // pred_region
        %s1123 = ssub.s32 %s16, 2
        // Predicated region
        $region41: #{tpu_custom_call.1} parent=39 // pred_check
          %p1124 = pneg %p92
        $region42: #{tpu_custom_call.1} parent=39 // pred_check_branch
          %1126 = sbr.rel (%p1124) target = $region44
        $region43: #{tpu_custom_call.1} parent=39 // pred_region
          %p1127 = scmp.lt.s32.totalorder %s22, 1
          %s1128 = scalar_select %p1127, %s22, 1
          %s1129 = smul.addr %s1128, 32
          %s1130 = smul.addr %s1129, 8
          %s1131 = scalar_lea.vmem %s3, %s1130
        $region44: #{tpu_custom_call.1} parent=39 // pred_fallthru
          _
      $region40: #{tpu_custom_call.1} parent=5 // pred_fallthru
        _
    $region6: #{tpu_custom_call.1} parent=1 // loop_footer
      %s20 = sadd.s32 1, %s16
    $region7: #{tpu_custom_call.1} parent=1 // loop_footer_branch
      %15 = sbr.rel target = $region3
    $region8: #{tpu_custom_call.1} parent=1 // loop_exit
      _
    %1132 = vsyncpa [#allocation6], 1
    %s1133 = scalar_lea.sflag [#allocation6], 1
    %1134 = vsyncpa %s1133, 1

</llo_original>
